<compile_context>
chip_gen: v5e
topology: v5e:2x2
jax: 0.10.0
libtpu: 0.0.40
codegen_flags: <defaults>
</compile_context>

<pallas_src>
import jax
import jax.numpy as jnp
from jax.experimental import pallas as pl
from jax.experimental.pallas import tpu as pltpu


def make_fm_kernel(n_classes: int, k: int, mxu_dtype):
    """Builds the kernel body (C, K, MXU dtype captured statically)."""
    C, K = n_classes, k

    def fm_kernel(x_ref, wv_ref, v2s_ref, b_ref, o_ref):
        x = x_ref[...]                                   # (TB, F) f32
        xm = x.astype(mxu_dtype)                         # MXU operand

        # ---- fused GEMM: x @ [W^T | V_flat]  -> (TB, C + K*C), f32 accum
        lin_xv = jnp.dot(xm, wv_ref[...], preferred_element_type=jnp.float32)
        lin = lin_xv[:, :C] + b_ref[...]                 # (TB, C) f32
        xv = lin_xv[:, C:]                               # (TB, K*C) factor-major

        # ---- x^2 @ (sum_k V^2)  -> (TB, C)
        xsq = (x * x).astype(mxu_dtype)                  # square in f32, cast for MXU
        x2v2 = jnp.dot(xsq, v2s_ref[...], preferred_element_type=jnp.float32)

        # ---- sum_k (x @ V[:, k, c])^2 via K static lane slices, tree reduction
        xv2 = xv * xv                                    # f32 (VPU)
        parts = [xv2[:, j * C:(j + 1) * C] for j in range(K)]   # K x (TB, C)
        while len(parts) > 1:
            nxt = []
            for a in range(0, len(parts) - 1, 2):
                nxt.append(parts[a] + parts[a + 1])
            if len(parts) % 2:
                nxt.append(parts[-1])
            parts = nxt
        sumk = parts[0]                                  # (TB, C)

        inter = 0.5 * (sumk - x2v2)                      # f32 (cancellation-sensitive)
        o_ref[...] = (lin + inter).astype(o_ref.dtype)

    return fm_kernel


def _pick_tile_b(batch: int, n_features: int,
                 x_itemsize: int = 4, x_budget_bytes: int = 8 << 20) -> int:
    """Batch tile sized so double-buffered x stays within a v7x-safe budget."""
    tb = x_budget_bytes // max(1, 2 * n_features * x_itemsize)
    tb = max(8, min(tb, 1024))
    if tb >= batch:
        return batch                 # full dim: any size is legal
    return max(8, (tb // 8) * 8)     # partial tile: keep a multiple of 8


def factorization_machine(x, weight, bias, V, *,
                          mxu_dtype=jnp.bfloat16, tile_b=None):
    """x: (B, F); weight: (C, F) (PyTorch nn.Linear layout); bias: (C,); V: (F, K, C)."""
    B, F = x.shape
    C = weight.shape[0]
    K = V.shape[1]

    # Resident operands (prepared once in plain JAX).
    w_t = weight.T.astype(mxu_dtype)                       # (F, C)
    v_flat = V.reshape(F, K * C).astype(mxu_dtype)         # (F, K*C), factor-major
    wv = jnp.concatenate([w_t, v_flat], axis=1)            # (F, C + K*C)
    v2sum = jnp.sum(V.astype(jnp.float32) ** 2, axis=1).astype(mxu_dtype)  # (F, C)
    b2 = bias.astype(jnp.float32).reshape(1, C)            # (1, C)

    tb = _pick_tile_b(B, F) if tile_b is None else tile_b
    grid = (pl.cdiv(B, tb),)

    flops = 2 * B * F * (C + K * C + C) + 6 * B * (K * C + C)
    bytes_accessed = (x.size * x.dtype.itemsize
                      + wv.size * wv.dtype.itemsize
                      + v2sum.size * v2sum.dtype.itemsize
                      + b2.size * b2.dtype.itemsize
                      + B * C * x.dtype.itemsize)

    out = pl.pallas_call(
        make_fm_kernel(C, K, mxu_dtype),
        out_shape=jax.ShapeDtypeStruct((B, C), x.dtype),
        grid=grid,
        in_specs=[
            pl.BlockSpec((tb, F), lambda i: (i, 0)),         # x: streamed per tile
            pl.BlockSpec((F, C + K * C), lambda i: (0, 0)),  # [W^T | V]: resident
            pl.BlockSpec((F, C), lambda i: (0, 0)),          # sum_k V^2: resident
            pl.BlockSpec((1, C), lambda i: (0, 0)),          # bias: resident
        ],
        out_specs=pl.BlockSpec((tb, C), lambda i: (i, 0)),
        compiler_params=pltpu.CompilerParams(
            dimension_semantics=("parallel",),
            vmem_limit_bytes=32 * 1024 * 1024,
        ),
        cost_estimate=pl.CostEstimate(flops=flops, transcendentals=0,
                                      bytes_accessed=bytes_accessed),
    )(x, wv, v2sum, b2)
    return out


def reference_fm(x, weight, bias, V):
    """Pure-JAX reference matching the PyTorch forward exactly."""
    lin_out = x @ weight.T + bias
    C = V.shape[2]
    inters = []
    for c in range(C):
        V_c = V[:, :, c]
        x_v = x @ V_c
        x2_v2 = (x * x) @ (V_c * V_c)
        inter_c = 0.5 * jnp.sum(x_v * x_v - x2_v2, axis=1, keepdims=True)
        inters.append(inter_c)
    return lin_out + jnp.concatenate(inters, axis=1)


if __name__ == "__main__":
    B, F, K, C = 64, 32, 8, 8   # batch, n_features, k, n_classes

    key = jax.random.PRNGKey(0)
    kx, kw, kb, kv = jax.random.split(key, 4)

    x = jax.random.normal(kx, (B, F), dtype=jnp.float32)
    # nn.Linear(F, C): weight (C, F), bias (C,)
    weight = jax.random.normal(kw, (C, F), dtype=jnp.float32) * 0.1
    bias = jax.random.normal(kb, (C,), dtype=jnp.float32) * 0.1
    # nn.Parameter(torch.randn(F, K, C) * 0.01)
    V = jax.random.normal(kv, (F, K, C), dtype=jnp.float32) * 0.01

    ref = reference_fm(x, weight, bias, V)

    # f32 MXU path, multi-step grid (tile_b=16 -> 4 grid steps): exact check.
    out_f32 = factorization_machine(x, weight, bias, V,
                                    mxu_dtype=jnp.float32, tile_b=16)
    out_f32 = jax.block_until_ready(out_f32)
    assert out_f32.shape == (B, C)
    assert jnp.allclose(out_f32, ref, atol=1e-5, rtol=1e-5), "f32 mismatch vs reference"

    # Default bf16-MXU path (v6e/v7x fast path); f32 accumulation + elementwise.
    out_bf16 = factorization_machine(x, weight, bias, V)
    out_bf16 = jax.block_until_ready(out_bf16)
    assert out_bf16.shape == (B, C)
    assert jnp.allclose(out_bf16, ref, atol=3e-2, rtol=3e-2), "bf16 mismatch vs reference"

    print("KERNEL_OK")
</pallas_src>

<mosaic_0001>
module attributes {stable_mosaic.version = 11 : i64} {
  func.func @fm_kernel(%arg0: i32, %arg1: memref<16x32xf32, #tpu.memory_space<vmem>>, %arg2: memref<32x72xf32, #tpu.memory_space<vmem>>, %arg3: memref<32x8xf32, #tpu.memory_space<vmem>>, %arg4: memref<1x8xf32, #tpu.memory_space<vmem>>, %arg5: memref<16x8xf32, #tpu.memory_space<vmem>>) attributes {dimension_semantics = [#tpu.dimension_semantics<parallel>], iteration_bounds = array<i64: 4>, scalar_prefetch = 0 : i64, scratch_operands = 0 : i64, tpu.core_type = #tpu.core_type<tc>, window_params = [{transform_indices = @transform_0, window_bounds = array<i64: 16, 32>}, {pipeline_mode = #tpu.pipeline_mode<synchronous>, transform_indices = @transform_1, window_bounds = array<i64: 32, 72>}, {pipeline_mode = #tpu.pipeline_mode<synchronous>, transform_indices = @transform_2, window_bounds = array<i64: 32, 8>}, {pipeline_mode = #tpu.pipeline_mode<synchronous>, transform_indices = @transform_3, window_bounds = array<i64: 1, 8>}, {transform_indices = @transform_4, window_bounds = array<i64: 16, 8>}]} {
    %c0 = arith.constant 0 : index
    %c0_0 = arith.constant 0 : index
    %0 = vector.load %arg1[%c0, %c0_0] : memref<16x32xf32, #tpu.memory_space<vmem>>, vector<16x32xf32>
    %c0_1 = arith.constant 0 : index
    %c0_2 = arith.constant 0 : index
    %1 = vector.load %arg2[%c0_1, %c0_2] : memref<32x72xf32, #tpu.memory_space<vmem>>, vector<32x72xf32>
    %cst = arith.constant dense<0.000000e+00> : vector<16x72xf32>
    %2 = tpu.matmul %0, %1, %cst {dimension_numbers = #tpu.dot_dimension_numbers<[1], [0], [0], [1], [0, 0, 1, 1], [], []>} : vector<16x32xf32>, vector<32x72xf32>, vector<16x72xf32> -> vector<16x72xf32>
    %3 = vector.extract_strided_slice %2 {offsets = [0, 0], sizes = [16, 8], strides = [1, 1]} : vector<16x72xf32> to vector<16x8xf32>
    %c0_3 = arith.constant 0 : index
    %c0_4 = arith.constant 0 : index
    %4 = vector.load %arg4[%c0_3, %c0_4] : memref<1x8xf32, #tpu.memory_space<vmem>>, vector<1x8xf32>
    %5 = vector.broadcast %4 : vector<1x8xf32> to vector<16x8xf32>
    %6 = arith.addf %3, %5 : vector<16x8xf32>
    %7 = vector.extract_strided_slice %2 {offsets = [0, 8], sizes = [16, 64], strides = [1, 1]} : vector<16x72xf32> to vector<16x64xf32>
    %8 = arith.mulf %0, %0 : vector<16x32xf32>
    %c0_5 = arith.constant 0 : index
    %c0_6 = arith.constant 0 : index
    %9 = vector.load %arg3[%c0_5, %c0_6] : memref<32x8xf32, #tpu.memory_space<vmem>>, vector<32x8xf32>
    %cst_7 = arith.constant dense<0.000000e+00> : vector<16x8xf32>
    %10 = tpu.matmul %8, %9, %cst_7 {dimension_numbers = #tpu.dot_dimension_numbers<[1], [0], [0], [1], [0, 0, 1, 1], [], []>} : vector<16x32xf32>, vector<32x8xf32>, vector<16x8xf32> -> vector<16x8xf32>
    %11 = arith.mulf %7, %7 : vector<16x64xf32>
    %12 = vector.extract_strided_slice %11 {offsets = [0, 0], sizes = [16, 8], strides = [1, 1]} : vector<16x64xf32> to vector<16x8xf32>
    %13 = vector.extract_strided_slice %11 {offsets = [0, 8], sizes = [16, 8], strides = [1, 1]} : vector<16x64xf32> to vector<16x8xf32>
    %14 = vector.extract_strided_slice %11 {offsets = [0, 16], sizes = [16, 8], strides = [1, 1]} : vector<16x64xf32> to vector<16x8xf32>
    %15 = vector.extract_strided_slice %11 {offsets = [0, 24], sizes = [16, 8], strides = [1, 1]} : vector<16x64xf32> to vector<16x8xf32>
    %16 = vector.extract_strided_slice %11 {offsets = [0, 32], sizes = [16, 8], strides = [1, 1]} : vector<16x64xf32> to vector<16x8xf32>
    %17 = vector.extract_strided_slice %11 {offsets = [0, 40], sizes = [16, 8], strides = [1, 1]} : vector<16x64xf32> to vector<16x8xf32>
    %18 = vector.extract_strided_slice %11 {offsets = [0, 48], sizes = [16, 8], strides = [1, 1]} : vector<16x64xf32> to vector<16x8xf32>
    %19 = vector.extract_strided_slice %11 {offsets = [0, 56], sizes = [16, 8], strides = [1, 1]} : vector<16x64xf32> to vector<16x8xf32>
    %20 = arith.addf %12, %13 : vector<16x8xf32>
    %21 = arith.addf %14, %15 : vector<16x8xf32>
    %22 = arith.addf %16, %17 : vector<16x8xf32>
    %23 = arith.addf %18, %19 : vector<16x8xf32>
    %24 = arith.addf %20, %21 : vector<16x8xf32>
    %25 = arith.addf %22, %23 : vector<16x8xf32>
    %26 = arith.addf %24, %25 : vector<16x8xf32>
    %27 = arith.subf %26, %10 : vector<16x8xf32>
    %cst_8 = arith.constant 5.000000e-01 : f32
    %28 = vector.broadcast %cst_8 : f32 to vector<16x8xf32>
    %29 = arith.mulf %28, %27 : vector<16x8xf32>
    %30 = arith.addf %6, %29 : vector<16x8xf32>
    %c0_9 = arith.constant 0 : index
    %c0_10 = arith.constant 0 : index
    %31 = vector.load %arg5[%c0_9, %c0_10] : memref<16x8xf32, #tpu.memory_space<vmem>>, vector<16x8xf32>
    tpu.vector_store %arg5[%c0_9, %c0_10], %30 {strides = array<i32>} : memref<16x8xf32, #tpu.memory_space<vmem>>, vector<16x8xf32>,
    return
  }
  func.func @transform_0(%arg0: i32) -> (i32, i32) {
    %c0_i32 = arith.constant 0 : i32
    %c0_i32_0 = arith.constant 0 : i32
    return %arg0, %c0_i32 : i32, i32
  }
  func.func @transform_1(%arg0: i32) -> (i32, i32) {
    %c0_i32 = arith.constant 0 : i32
    %c0_i32_0 = arith.constant 0 : i32
    %c0_i32_1 = arith.constant 0 : i32
    return %c0_i32, %c0_i32_0 : i32, i32
  }
  func.func @transform_2(%arg0: i32) -> (i32, i32) {
    %c0_i32 = arith.constant 0 : i32
    %c0_i32_0 = arith.constant 0 : i32
    %c0_i32_1 = arith.constant 0 : i32
    return %c0_i32, %c0_i32_0 : i32, i32
  }
  func.func @transform_3(%arg0: i32) -> (i32, i32) {
    %c0_i32 = arith.constant 0 : i32
    %c0_i32_0 = arith.constant 0 : i32
    %c0_i32_1 = arith.constant 0 : i32
    return %c0_i32, %c0_i32_0 : i32, i32
  }
  func.func @transform_4(%arg0: i32) -> (i32, i32) {
    %c0_i32 = arith.constant 0 : i32
    %c0_i32_0 = arith.constant 0 : i32
    return %arg0, %c0_i32 : i32, i32
  }
}

</mosaic_0001>

<llo_original>
// kernel: tpu_custom_call.1
$region0: #{tpu_custom_call.1}
  #allocation0 [shape = 'u32[]', space=smem, size = 0x4, offset = 0x4, fixed_abs, tag = 'smem constant byte address 0x4 - core index']
  #allocation1 [shape = 'u32[72,128]{1,0:T(1,128)}', space=vmem, size = 0x9000, scoped, tag = 'internal scratch']
  %s0 = inlined_call_operand.vmem [shape: f32[64,32], index: 0, kind: input, shape index: {}]
  %s1 = inlined_call_operand.vmem [shape: f32[32,72], index: 1, kind: input, shape index: {}]
  %s2 = inlined_call_operand.vmem [shape: f32[32,8], index: 2, kind: input, shape index: {}]
  %s3 = inlined_call_operand.vmem [shape: f32[1,8], index: 3, kind: input, shape index: {}]
  %s4 = inlined_call_operand.vmem [shape: f32[64,8], index: 4, kind: output, shape index: {}]
  %s5 = sld [smem:[#allocation0]]
  $region49: #{tpu_custom_call.1} parent=0
    _
  %s7 = ssub.s32 1, %s5
  %s8 = scalar_select 0, %s7, %s5
  loop: start=0, step=1, limit=6
  $region2: #{tpu_custom_call.1} parent=0 // loop_pre_header
    _
  $region3: #{tpu_custom_call.1} parent=0 // loop_header
    %s10 = sphi 0, %s14
    %p11 = scmp.ge.s32.totalorder %s10, 6
    %s20 = sphi 0, %s22
    %s23 = sphi 0, %s20
    %s24 = sphi 0, %s23
    %s40 = sphi 0, %s24
    %s44 = sphi 0, %s44
    %s46 = sphi 0, %s44
    %s47 = sphi 0, %s46
    %s61 = sphi 0, %s47
    %s65 = sphi 0, %s65
    %s67 = sphi 0, %s65
    %s68 = sphi 0, %s67
    %s82 = sphi 0, %s68
    %s86 = sphi 0, %s86
    %s88 = sphi 0, %s86
    %s89 = sphi 0, %s88
    %s103 = sphi 0, %s89
    %s109 = sphi 0, %s111
    %s112 = sphi 0, %s109
    %s113 = sphi 0, %s112
    %s129 = sphi 0, %s113
  $region4: #{tpu_custom_call.1} parent=0 // loop_header_branch
    %13 = sbr.rel (%p11) target = $region8
  $region5: #{tpu_custom_call.1} parent=0 // loop_body
    %s15 = ssub.s32 %s10, 1
    %s16 = ssub.s32 %s10, 2
    %s17 = sadd.s32 %s10, 1
    %s18 = ssub.s32 %s10, %s17
    %p19 = scmp.eq.s32.totalorder %s18, 0
    %s21 = sadd.s32 %s20, 1
    %s22 = scalar_select %p19, %s20, %s21
    %p25 = pneg %p19
    %p26 = scmp.eq.s32.totalorder %s10, 3
    %p27 = por %p25, %p26
    %p28 = scmp.ne.s32.totalorder %s20, %s23
    %p29 = scmp.eq.s32.totalorder %s10, 0
    %p30 = por %p28, %p29
    %p31 = scmp.ne.s32.totalorder %s20, %s23
    %p32 = scmp.eq.s32.totalorder %s15, 3
    %p33 = por %p31, %p32
    %p34 = scmp.ne.s32.totalorder %s23, %s24
    %p35 = scmp.eq.s32.totalorder %s15, 0
    %p36 = por %p34, %p35
    %p37 = scmp.ne.s32.totalorder %s23, %s24
    %p38 = scmp.eq.s32.totalorder %s16, 3
    %p39 = por %p37, %p38
    %p41 = scmp.ne.s32.totalorder %s24, %s40
    %p42 = scmp.eq.s32.totalorder %s16, 0
    %p43 = por %p41, %p42
    %s45 = sadd.s32 %s44, 1
    %p48 = scmp.eq.s32.totalorder %s10, 3
    %p49 = scmp.ne.s32.totalorder %s44, %s46
    %p50 = scmp.eq.s32.totalorder %s10, 0
    %p51 = por %p49, %p50
    %p52 = scmp.ne.s32.totalorder %s44, %s46
    %p53 = scmp.eq.s32.totalorder %s15, 3
    %p54 = por %p52, %p53
    %p55 = scmp.ne.s32.totalorder %s46, %s47
    %p56 = scmp.eq.s32.totalorder %s15, 0
    %p57 = por %p55, %p56
    %p58 = scmp.ne.s32.totalorder %s46, %s47
    %p59 = scmp.eq.s32.totalorder %s16, 3
    %p60 = por %p58, %p59
    %p62 = scmp.ne.s32.totalorder %s47, %s61
    %p63 = scmp.eq.s32.totalorder %s16, 0
    %p64 = por %p62, %p63
    %s66 = sadd.s32 %s65, 1
    %p69 = scmp.eq.s32.totalorder %s10, 3
    %p70 = scmp.ne.s32.totalorder %s65, %s67
    %p71 = scmp.eq.s32.totalorder %s10, 0
    %p72 = por %p70, %p71
    %p73 = scmp.ne.s32.totalorder %s65, %s67
    %p74 = scmp.eq.s32.totalorder %s15, 3
    %p75 = por %p73, %p74
    %p76 = scmp.ne.s32.totalorder %s67, %s68
    %p77 = scmp.eq.s32.totalorder %s15, 0
    %p78 = por %p76, %p77
    %p79 = scmp.ne.s32.totalorder %s67, %s68
    %p80 = scmp.eq.s32.totalorder %s16, 3
    %p81 = por %p79, %p80
    %p83 = scmp.ne.s32.totalorder %s68, %s82
    %p84 = scmp.eq.s32.totalorder %s16, 0
    %p85 = por %p83, %p84
    %s87 = sadd.s32 %s86, 1
    %p90 = scmp.eq.s32.totalorder %s10, 3
    %p91 = scmp.ne.s32.totalorder %s86, %s88
    %p92 = scmp.eq.s32.totalorder %s10, 0
    %p93 = por %p91, %p92
    %p94 = scmp.ne.s32.totalorder %s86, %s88
    %p95 = scmp.eq.s32.totalorder %s15, 3
    %p96 = por %p94, %p95
    %p97 = scmp.ne.s32.totalorder %s88, %s89
    %p98 = scmp.eq.s32.totalorder %s15, 0
    %p99 = por %p97, %p98
    %p100 = scmp.ne.s32.totalorder %s88, %s89
    %p101 = scmp.eq.s32.totalorder %s16, 3
    %p102 = por %p100, %p101
    %p104 = scmp.ne.s32.totalorder %s89, %s103
    %p105 = scmp.eq.s32.totalorder %s16, 0
    %p106 = por %p104, %p105
    %s107 = ssub.s32 %s10, %s17
    %p108 = scmp.eq.s32.totalorder %s107, 0
    %s110 = sadd.s32 %s109, 1
    %s111 = scalar_select %p108, %s109, %s110
    %p114 = pneg %p108
    %p115 = scmp.eq.s32.totalorder %s10, 3
    %p116 = por %p114, %p115
    %p117 = scmp.ne.s32.totalorder %s109, %s112
    %p118 = scmp.eq.s32.totalorder %s10, 0
    %p119 = por %p117, %p118
    %p120 = scmp.ne.s32.totalorder %s109, %s112
    %p121 = scmp.eq.s32.totalorder %s15, 3
    %p122 = por %p120, %p121
    %p123 = scmp.ne.s32.totalorder %s112, %s113
    %p124 = scmp.eq.s32.totalorder %s15, 0
    %p125 = por %p123, %p124
    %p126 = scmp.ne.s32.totalorder %s112, %s113
    %p127 = scmp.eq.s32.totalorder %s16, 3
    %p128 = por %p126, %p127
    %p130 = scmp.ne.s32.totalorder %s113, %s129
    %p131 = scmp.eq.s32.totalorder %s16, 0
    %p132 = por %p130, %p131
    %p133 = scmp.le.s32.totalorder 1, %s10
    %p134 = scmp.lt.s32.totalorder %s10, 5
    %p135 = pnand %p133, %p134
    %p136 = pneg %p135
    // Predicated region
    $region9: #{tpu_custom_call.1} parent=5 // pred_check
      _
    $region10: #{tpu_custom_call.1} parent=5 // pred_check_branch
      %138 = sbr.rel (%p135) target = $region12
    $region11: #{tpu_custom_call.1} parent=5 // pred_region
      %s139 = ssub.s32 %s10, 1
      // Predicated region
      $region13: #{tpu_custom_call.1} parent=11 // pred_check
        %p140 = pneg %p57
      $region14: #{tpu_custom_call.1} parent=11 // pred_check_branch
        %142 = sbr.rel (%p140) target = $region16
      $region15: #{tpu_custom_call.1} parent=11 // pred_region
        _
      $region16: #{tpu_custom_call.1} parent=11 // pred_fallthru
        _
      // Predicated region
      $region17: #{tpu_custom_call.1} parent=11 // pred_check
        %p143 = pneg %p78
      $region18: #{tpu_custom_call.1} parent=11 // pred_check_branch
        %145 = sbr.rel (%p143) target = $region20
      $region19: #{tpu_custom_call.1} parent=11 // pred_region
        _
      $region20: #{tpu_custom_call.1} parent=11 // pred_fallthru
        _
      // Predicated region
      $region21: #{tpu_custom_call.1} parent=11 // pred_check
        %p146 = pneg %p99
      $region22: #{tpu_custom_call.1} parent=11 // pred_check_branch
        %148 = sbr.rel (%p146) target = $region24
      $region23: #{tpu_custom_call.1} parent=11 // pred_region
        _
      $region24: #{tpu_custom_call.1} parent=11 // pred_fallthru
        _
    $region12: #{tpu_custom_call.1} parent=5 // pred_fallthru
      _
    %p149 = scmp.lt.s32.totalorder %s10, 4
    // Predicated region
    $region25: #{tpu_custom_call.1} parent=5 // pred_check
      %p150 = pneg %p149
    $region26: #{tpu_custom_call.1} parent=5 // pred_check_branch
      %152 = sbr.rel (%p150) target = $region28
    $region27: #{tpu_custom_call.1} parent=5 // pred_region
      // Predicated region
      $region29: #{tpu_custom_call.1} parent=27 // pred_check
        %p153 = pneg %p30
      $region30: #{tpu_custom_call.1} parent=27 // pred_check_branch
        %155 = sbr.rel (%p153) target = $region32
      $region31: #{tpu_custom_call.1} parent=27 // pred_region
        %s156 = smul.u32 2, %s10
        %p157 = scmp.lt.s32.totalorder %s156, 7
        %s158 = scalar_select %p157, %s156, 7
        %s159 = smul.addr %s158, 8
        %s160 = scalar_lea.vmem %s0, %s159
        %s161 = smul.u32 2, %s10
      $region32: #{tpu_custom_call.1} parent=27 // pred_fallthru
        _
    $region28: #{tpu_custom_call.1} parent=5 // pred_fallthru
      _
    %p162 = scmp.le.s32.totalorder 1, %s10
    %p163 = scmp.lt.s32.totalorder %s10, 5
    %p164 = pnand %p162, %p163
    %p165 = pneg %p164
    // Predicated region
    $region33: #{tpu_custom_call.1} parent=5 // pred_check
      _
    $region34: #{tpu_custom_call.1} parent=5 // pred_check_branch
      %167 = sbr.rel (%p164) target = $region36
    $region35: #{tpu_custom_call.1} parent=5 // pred_region
      %s168 = ssub.s32 %s10, 1
      %s169 = smul.u32 2, %s15
      %p170 = scmp.lt.s32.totalorder %s169, 7
      %s171 = scalar_select %p170, %s169, 7
      %s172 = smul.addr %s171, 8
      %s173 = scalar_lea.vmem %s0, %s172
      %p174 = pneg %p36
      %p175 = pneg %p33
      %p176 = pneg %p57
      %p177 = pneg %p54
      %p178 = pneg %p78
      %p179 = pneg %p75
      %p180 = pneg %p99
      %p181 = pneg %p96
      %p182 = pneg %p125
      %p183 = pneg %p122
      %s184 = smul.u32 2, %s15
      %p185 = scmp.lt.s32.totalorder %s184, 7
      %s186 = scalar_select %p185, %s184, 7
      %s187 = smul.addr %s186, 8
      %s188 = scalar_lea.vmem %s4, %s187
      %s189 = smul.u32 2, %s15
      %p190 = scmp.lt.s32.totalorder %s189, 7
      %s191 = scalar_select %p190, %s189, 7
      %s192 = smul.addr %s191, 8
      %s193 = scalar_lea.vmem %s0, %s192
      %s194 = smul.u32 2, %s15
      %s195 = smul.u32 2, %s15
      %p196 = scmp.lt.s32.totalorder %s195, 7
      %s197 = scalar_select %p196, %s195, 7
      %s198 = smul.addr %s197, 8
      %s199 = scalar_lea.vmem %s4, %s198
      %s200 = smul.u32 2, %s15
      %v201 = vld [vmem:[%s193] sm:$0xff]
      %v202 = vld [vmem:[%s193 + $0x8] sm:$0xff]
      %v203 = vld [vmem:[%s1] sm:$0xff]
      %v204 = vld [vmem:[%s1 + $0x8] sm:$0xff]
      %v205 = vld [vmem:[%s1 + $0x10] sm:$0xff]
      %v206 = vld [vmem:[%s1 + $0x18] sm:$0xff]
      %vm207 = vcmask 261120
      %v209 = vsel %vm207, %v201, 0
      %v212 = vsel %vm207, %v202, 0
      %214 = vmatpush.msra.mxu0 0.0
      %215 = vmatpush.msra.mxu0 0.0
      %216 = vmatpush.msra.mxu0 0.0
      %217 = vmatpush.msra.mxu0 0.0
      %218 = vmatpush.msra.mxu0 0.0
      %219 = vmatpush.msra.mxu0 0.0
      %220 = vmatpush.msra.mxu0 0.0
      %221 = vmatpush.msra.mxu0 0.0
      %222 = vmatpush.msra.mxu0 0.0
      %223 = vmatpush.msra.mxu0 0.0
      %224 = vmatpush.msra.mxu0 0.0
      %225 = vmatpush.msra.mxu0 0.0
      %226 = vmatpush.msra.mxu0 %v206
      %227 = vmatpush.msra.mxu0 %v205
      %228 = vmatpush.msra.mxu0 %v204
      %229 = vmatpush.msra.mxu0 %v203
      %230 = vmatmul.f32.gmra.mxu0 %v209
      %v231 = vpop.f32.mrf.mxu0
      %v232 = vadd.f32 0.0, %v231
      %233 = vmatmul.f32.gmra.mxu0 %v212
      %v234 = vpop.f32.mrf.mxu0
      %v235 = vadd.f32 0.0, %v234
      %236 = vdwg.mxu0
      %v237 = vld [vmem:[%s3] sm:$0x1]
      %v239 = vperm.slane %v237, 0
      %v241 = vadd.f32 %v232, %v239
      %v242 = vadd.f32 %v235, %v239
      %v243 = vmul.f32 %v201, %v201
      %v244 = vmul.f32 %v202, %v202
      %v245 = vld [vmem:[%s2] sm:$0xff]
      %v246 = vld [vmem:[%s2 + $0x8] sm:$0xff]
      %v247 = vld [vmem:[%s2 + $0x10] sm:$0xff]
      %v248 = vld [vmem:[%s2 + $0x18] sm:$0xff]
      %v250 = vsel %vm207, %v243, 0
      %v253 = vsel %vm207, %v244, 0
      %255 = vmatpush.msra.mxu0 0.0
      %256 = vmatpush.msra.mxu0 0.0
      %257 = vmatpush.msra.mxu0 0.0
      %258 = vmatpush.msra.mxu0 0.0
      %259 = vmatpush.msra.mxu0 0.0
      %260 = vmatpush.msra.mxu0 0.0
      %261 = vmatpush.msra.mxu0 0.0
      %262 = vmatpush.msra.mxu0 0.0
      %263 = vmatpush.msra.mxu0 0.0
      %264 = vmatpush.msra.mxu0 0.0
      %265 = vmatpush.msra.mxu0 0.0
      %266 = vmatpush.msra.mxu0 0.0
      %267 = vmatpush.msra.mxu0 %v248
      %268 = vmatpush.msra.mxu0 %v247
      %269 = vmatpush.msra.mxu0 %v246
      %270 = vmatpush.msra.mxu0 %v245
      %271 = vmatmul.f32.gmra.mxu0 %v250
      %v272 = vpop.f32.mrf.mxu0
      %v273 = vadd.f32 0.0, %v272
      %274 = vmatmul.f32.gmra.mxu0 %v253
      %v275 = vpop.f32.mrf.mxu0
      %v276 = vadd.f32 0.0, %v275
      %277 = vdwg.mxu0
      %v278 = vmul.f32 %v232, %v232
      %v279 = vmul.f32 %v235, %v235
      %282 = vrot.lane.b32.xlu0 %v278, 120
      %v283 = vpop.permute.xlu0 %282
      %284 = vrot.lane.b32.xlu0 %v279, 120
      %v285 = vpop.permute.xlu0 %284
      %v288 = vadd.f32 %v278, %v283
      %v289 = vadd.f32 %v279, %v285
      %292 = vrot.lane.b32.xlu0 %v288, 112
      %v293 = vpop.permute.xlu0 %292
      %294 = vrot.lane.b32.xlu0 %v289, 112
      %v295 = vpop.permute.xlu0 %294
      %v298 = vadd.f32 %v288, %v293
      %v299 = vadd.f32 %v289, %v295
      %302 = vrot.lane.b32.xlu0 %v298, 96
      %v303 = vpop.permute.xlu0 %302
      %304 = vrot.lane.b32.xlu0 %v299, 96
      %v305 = vpop.permute.xlu0 %304
      %v308 = vadd.f32 %v298, %v303
      %v309 = vadd.f32 %v299, %v305
      %312 = vrot.lane.b32.xlu0 %v273, 8
      %v313 = vpop.permute.xlu0 %312
      %314 = vrot.lane.b32.xlu0 %v276, 8
      %v315 = vpop.permute.xlu0 %314
      %v318 = vsub.f32 %v308, %v313
      %v319 = vsub.f32 %v309, %v315
      %v320 = vmul.f32 %v318, 0.5
      %v321 = vmul.f32 %v319, 0.5
      %324 = vrot.lane.b32.xlu0 %v320, 120
      %v325 = vpop.permute.xlu0 %324
      %326 = vrot.lane.b32.xlu0 %v321, 120
      %v327 = vpop.permute.xlu0 %326
      %v330 = vadd.f32 %v241, %v325
      %v331 = vadd.f32 %v242, %v327
      %vm332 = vcmask 64512
      %333 = vst.msk [vmem:[%s199] sm:$0xff] %vm332, %v330
      %334 = vst.msk [vmem:[%s199 + $0x8] sm:$0xff] %vm332, %v331
      %s335 = smul.u32 2, %s15
      %p336 = scmp.lt.s32.totalorder %s335, 7
      %s337 = scalar_select %p336, %s335, 7
      %s338 = smul.addr %s337, 8
      %s339 = scalar_lea.vmem %s4, %s338
      // Predicated region
      $region37: #{tpu_custom_call.1} parent=35 // pred_check
        %p340 = pneg %p122
      $region38: #{tpu_custom_call.1} parent=35 // pred_check_branch
        %342 = sbr.rel (%p340) target = $region40
      $region39: #{tpu_custom_call.1} parent=35 // pred_region
        %s343 = smul.u32 2, %s15
      $region40: #{tpu_custom_call.1} parent=35 // pred_fallthru
        _
    $region36: #{tpu_custom_call.1} parent=5 // pred_fallthru
      _
    %p344 = scmp.le.s32.totalorder 2, %s10
    // Predicated region
    $region41: #{tpu_custom_call.1} parent=5 // pred_check
      %p345 = pneg %p344
    $region42: #{tpu_custom_call.1} parent=5 // pred_check_branch
      %347 = sbr.rel (%p345) target = $region44
    $region43: #{tpu_custom_call.1} parent=5 // pred_region
      %s348 = ssub.s32 %s10, 2
      // Predicated region
      $region45: #{tpu_custom_call.1} parent=43 // pred_check
        %p349 = pneg %p128
      $region46: #{tpu_custom_call.1} parent=43 // pred_check_branch
        %351 = sbr.rel (%p349) target = $region48
      $region47: #{tpu_custom_call.1} parent=43 // pred_region
        %s352 = smul.u32 2, %s16
        %p353 = scmp.lt.s32.totalorder %s352, 7
        %s354 = scalar_select %p353, %s352, 7
        %s355 = smul.addr %s354, 8
        %s356 = scalar_lea.vmem %s4, %s355
      $region48: #{tpu_custom_call.1} parent=43 // pred_fallthru
        _
    $region44: #{tpu_custom_call.1} parent=5 // pred_fallthru
      _
  $region6: #{tpu_custom_call.1} parent=0 // loop_footer
    %s14 = sadd.s32 1, %s10
  $region7: #{tpu_custom_call.1} parent=0 // loop_footer_branch
    %9 = sbr.rel target = $region3
  $region8: #{tpu_custom_call.1} parent=0 // loop_exit
    _

</llo_original>
